<compile_context>
chip_gen: v7x
topology: tpu7x:2x2x1
jax: 0.10.0
libtpu: 0.0.40
codegen_flags: <defaults>
</compile_context>

<pallas_src>
import functools
import math

import jax
import jax.numpy as jnp
from jax.experimental import pallas as pl
from jax.experimental.pallas import tpu as pltpu


def _round_up(x, m):
    return ((x + m - 1) // m) * m


def _relpos_gather_kernel(pos_ref, tbl_ref, out_ref, *, maxlen, n_terms):
    """pos_ref: [TN, 1] int32; tbl_ref: [n_terms, vocab_pad, d_pad]; out_ref: [TN, d_pad]."""
    idx = jnp.clip(pos_ref[...], -maxlen, maxlen - 1) + maxlen       # [TN, 1], in [0, 2*maxlen)
    vocab = tbl_ref.shape[1]
    lane_iota = jax.lax.broadcasted_iota(jnp.int32, (1, vocab), 1)   # [1, vocab] lane iota
    onehot = (idx == lane_iota).astype(tbl_ref.dtype)                # [TN, vocab], bf16, exact 0/1
    acc = jnp.dot(onehot, tbl_ref[0], preferred_element_type=jnp.float32)
    for t in range(1, n_terms):   # static unroll; n_terms <= 3
        acc = acc + jnp.dot(onehot, tbl_ref[t], preferred_element_type=jnp.float32)
    out_ref[...] = acc.astype(out_ref.dtype)


def _vmem_estimate_bytes(block_n, vocab_pad, d_pad, n_terms, tbl_itemsize):
    pos_blk = block_n * 128 * 4 * 2                         # int32 tile pads lanes to 128; x2 buffers
    table = n_terms * vocab_pad * d_pad * tbl_itemsize * 2  # default double buffer (DMAed once)
    onehot = block_n * vocab_pad * (4 + tbl_itemsize)       # compare mask + bf16 one-hot intermediates
    acc = block_n * d_pad * 4                               # f32 matmul accumulator
    out_blk = block_n * d_pad * 4 * 2                       # double-buffered output block
    return pos_blk + table + onehot + acc + out_blk


def _vmem_capacity_bytes():
    try:
        return int(pltpu.get_tpu_info().vmem_capacity_bytes)
    except Exception:
        # Hardware query unavailable (e.g. interpret mode): assume the smallest generation (v7x).
        return 64 * 1024 * 1024


def _split_to_bf16_planes(table_f32, n_terms):
    """Decompose an f32 table into n_terms bf16 planes whose f32 sum reconstructs it.

    n_terms=3 reconstructs f32 to ~2^-24 relative error (effectively exact for a gather);
    n_terms=1 is a plain bf16 cast.
    """
    planes = []
    r = table_f32
    for _ in range(n_terms - 1):
        p = r.astype(jnp.bfloat16)
        planes.append(p)
        r = r - p.astype(jnp.float32)
    planes.append(r.astype(jnp.bfloat16))
    return jnp.stack(planes, axis=0)


def relative_positional_encoding(pos_seq, pe_k_weight, pe_v_weight=None, *,
                                 maxlen, block_n=512, f32_split_terms=3):
    """Pallas implementation of RelativePositionalEncoding.forward.

    pos_seq: int array, any shape.
    pe_k_weight: [2*maxlen, d_model].
    pe_v_weight: optional [2*maxlen, d_model] (embed_v=True case).
    Returns (emb_k, emb_v_or_None), each of shape pos_seq.shape + (d_model,).
    """
    orig_shape = pos_seq.shape
    vocab, d_model = pe_k_weight.shape
    assert vocab == 2 * maxlen
    out_dtype = pe_k_weight.dtype

    # embed_v: fuse the two tables on the lane axis -> one gather matmul, one lane-dense store.
    if pe_v_weight is None:
        table = pe_k_weight
    else:
        table = jnp.concatenate([pe_k_weight, pe_v_weight], axis=1)
    d_total = table.shape[1]

    n = int(math.prod(orig_shape)) if orig_shape else 1
    if n == 0:
        emb_k = jnp.zeros(orig_shape + (d_model,), out_dtype)
        emb_v = None if pe_v_weight is None else jnp.zeros(orig_shape + (d_model,), out_dtype)
        return emb_k, emb_v

    # Lane-dense layout: pad d to a multiple of 128 (unmasked vst + full MXU N tile) and the
    # vocab/sublane axis to a multiple of 8.  Padding is sliced off after the call.
    d_pad = _round_up(d_total, 128)
    vocab_pad = _round_up(vocab, 8)
    table = jnp.pad(table, ((0, vocab_pad - vocab), (0, d_pad - d_total)))

    # bf16 MXU path: bf16 tables gather directly; f32 tables via a (near-exact) 3-plane split.
    if table.dtype == jnp.bfloat16:
        planes = table[None]
        n_terms = 1
    else:
        n_terms = max(1, int(f32_split_terms))
        planes = _split_to_bf16_planes(table.astype(jnp.float32), n_terms)
    tbl_itemsize = 2  # bf16 planes

    pos_flat = pos_seq.reshape(n, 1).astype(jnp.int32)

    # ---- block sizing / VMEM budgeting -------------------------------------------------
    capacity = _vmem_capacity_bytes()
    budget = int(0.70 * capacity)  # leave headroom for compiler-internal scratch

    block = min(block_n, _round_up(max(n, 8), 8))          # don't over-pad tiny inputs
    if n >= 512:
        # Guarantee >=2 grid steps (the "parallel" axis shards across v7x's 2 TensorCores)
        # without dropping below the 256-wide MXU tile.
        block = min(block, max(256, _round_up(-(-n // 2), 256)))
    if block > 256:
        block = _round_up(block, 256)                      # v6e/v7x MXU tiles are 256-wide
    while block > 128 and _vmem_estimate_bytes(block, vocab_pad, d_pad, n_terms,
                                               tbl_itemsize) > budget:
        block //= 2

    n_pad = _round_up(n, block)
    if n_pad != n:
        # Padded rows (pos=0) gather row `maxlen` — harmless; dropped below.
        pos_flat = jnp.pad(pos_flat, ((0, n_pad - n), (0, 0)))
    grid = (n_pad // block,)

    est = _vmem_estimate_bytes(block, vocab_pad, d_pad, n_terms, tbl_itemsize)
    vmem_limit = int(min(int(0.9 * capacity), max(32 * 1024 * 1024, int(1.25 * est))))

    cost = pl.CostEstimate(
        flops=2 * n_pad * vocab_pad * d_pad * n_terms,
        transcendentals=0,
        bytes_accessed=(n_pad * 4
                        + n_terms * vocab_pad * d_pad * tbl_itemsize
                        + n_pad * d_pad * jnp.dtype(out_dtype).itemsize),
    )

    out = pl.pallas_call(
        functools.partial(_relpos_gather_kernel, maxlen=maxlen, n_terms=n_terms),
        out_shape=jax.ShapeDtypeStruct((n_pad, d_pad), out_dtype),
        grid=grid,
        in_specs=[
            pl.BlockSpec((block, 1), lambda i: (i, 0)),
            pl.BlockSpec((n_terms, vocab_pad, d_pad), lambda i: (0, 0, 0)),
        ],
        out_specs=pl.BlockSpec((block, d_pad), lambda i: (i, 0)),
        compiler_params=pltpu.CompilerParams(
            dimension_semantics=("parallel",),
            vmem_limit_bytes=vmem_limit,
        ),
        cost_estimate=cost,
    )(pos_flat, planes)

    out = out[:n]
    emb_k = out[:, :d_model].reshape(orig_shape + (d_model,))
    if pe_v_weight is None:
        emb_v = None
    else:
        emb_v = out[:, d_model:d_total].reshape(orig_shape + (d_model,))
    return emb_k, emb_v


def _reference(pos_seq, pe_k_weight, pe_v_weight, maxlen):
    idx = jnp.clip(pos_seq.astype(jnp.int32), -maxlen, maxlen - 1) + maxlen
    ek = jnp.take(pe_k_weight, idx, axis=0)
    ev = None if pe_v_weight is None else jnp.take(pe_v_weight, idx, axis=0)
    return ek, ev


if __name__ == "__main__":
    d_model = 32
    maxlen = 16
    seq = 8

    key = jax.random.PRNGKey(0)
    k_pe_k, k_pe_v = jax.random.split(key)
    # Deterministic synthetic embedding weights (nn.Embedding default init ~ N(0,1)).
    pe_k_weight = jax.random.normal(k_pe_k, (2 * maxlen, d_model), dtype=jnp.float32)
    pe_v_weight = jax.random.normal(k_pe_v, (2 * maxlen, d_model), dtype=jnp.float32)

    # Typical relative-position matrix; scaled by 3 so some entries exceed +/- maxlen
    # and the clamp path is exercised.
    pos_seq = (jnp.arange(seq)[:, None] - jnp.arange(seq)[None, :]) * 3
    pos_seq = pos_seq.astype(jnp.int32)  # shape [8, 8]

    # embed_v = False path (module default).
    emb_k, emb_v = relative_positional_encoding(pos_seq, pe_k_weight, None, maxlen=maxlen)
    jax.block_until_ready(emb_k)
    ref_k, _ = _reference(pos_seq, pe_k_weight, None, maxlen)
    assert emb_k.shape == (seq, seq, d_model)
    assert emb_v is None
    assert jnp.allclose(emb_k, ref_k, atol=1e-5), "pe_k mismatch"

    # embed_v = True path (single fused k||v gather inside the kernel).
    emb_k2, emb_v2 = relative_positional_encoding(
        pos_seq, pe_k_weight, pe_v_weight, maxlen=maxlen)
    jax.block_until_ready((emb_k2, emb_v2))
    ref_k2, ref_v2 = _reference(pos_seq, pe_k_weight, pe_v_weight, maxlen)
    assert jnp.allclose(emb_k2, ref_k2, atol=1e-5), "pe_k (embed_v) mismatch"
    assert jnp.allclose(emb_v2, ref_v2, atol=1e-5), "pe_v mismatch"

    # Larger case: multi-block grid, N padding, >=2 grid steps, lane-padded output path.
    seq_l = 48
    pos_seq_l = ((jnp.arange(seq_l)[:, None] - jnp.arange(seq_l)[None, :])).astype(jnp.int32)
    emb_k3, emb_v3 = relative_positional_encoding(
        pos_seq_l, pe_k_weight, pe_v_weight, maxlen=maxlen)
    jax.block_until_ready((emb_k3, emb_v3))
    ref_k3, ref_v3 = _reference(pos_seq_l, pe_k_weight, pe_v_weight, maxlen)
    assert emb_k3.shape == (seq_l, seq_l, d_model)
    assert jnp.allclose(emb_k3, ref_k3, atol=1e-5), "pe_k (large) mismatch"
    assert jnp.allclose(emb_v3, ref_v3, atol=1e-5), "pe_v (large) mismatch"

    print("KERNEL_OK")
</pallas_src>

<mosaic_0001>
module attributes {stable_mosaic.version = 11 : i64} {
  func.func @_relpos_gather_kernel(%arg0: i32, %arg1: memref<64x1xi32, #tpu.memory_space<vmem>>, %arg2: memref<3x32x128xbf16, #tpu.memory_space<vmem>>, %arg3: memref<64x128xf32, #tpu.memory_space<vmem>>) attributes {dimension_semantics = [#tpu.dimension_semantics<parallel>], iteration_bounds = array<i64: 1>, scalar_prefetch = 0 : i64, scratch_operands = 0 : i64, tpu.core_type = #tpu.core_type<tc>, window_params = [{transform_indices = @transform_0, window_bounds = array<i64: 64, 1>}, {pipeline_mode = #tpu.pipeline_mode<synchronous>, transform_indices = @transform_1, window_bounds = array<i64: 3, 32, 128>}, {transform_indices = @transform_2, window_bounds = array<i64: 64, 128>}]} {
    %c0 = arith.constant 0 : index
    %c0_0 = arith.constant 0 : index
    %0 = vector.load %arg1[%c0, %c0_0] : memref<64x1xi32, #tpu.memory_space<vmem>>, vector<64x1xi32>
    %c-16_i32 = arith.constant -16 : i32
    %c15_i32 = arith.constant 15 : i32
    %1 = vector.broadcast %c-16_i32 : i32 to vector<64x1xi32>
    %2 = arith.maxsi %1, %0 : vector<64x1xi32>
    %3 = vector.broadcast %c15_i32 : i32 to vector<64x1xi32>
    %4 = arith.minsi %3, %2 : vector<64x1xi32>
    %c16_i32 = arith.constant 16 : i32
    %5 = vector.broadcast %c16_i32 : i32 to vector<64x1xi32>
    %6 = arith.addi %4, %5 : vector<64x1xi32>
    %7 = tpu.iota {dimensions = array<i32: 1>} : vector<1x32xi32>
    %8 = vector.broadcast %6 : vector<64x1xi32> to vector<64x32xi32>
    %9 = vector.broadcast %7 : vector<1x32xi32> to vector<64x32xi32>
    %10 = arith.cmpi eq, %8, %9 : vector<64x32xi32>
    %11 = arith.extui %10 : vector<64x32xi1> to vector<64x32xi32>
    %12 = arith.sitofp %11 : vector<64x32xi32> to vector<64x32xf32>
    %13 = arith.truncf %12 : vector<64x32xf32> to vector<64x32xbf16>
    %c0_1 = arith.constant 0 : index
    %c0_2 = arith.constant 0 : index
    %c0_3 = arith.constant 0 : index
    %14 = vector.load %arg2[%c0_1, %c0_2, %c0_3] : memref<3x32x128xbf16, #tpu.memory_space<vmem>>, vector<1x32x128xbf16>
    %15 = vector.shape_cast %14 : vector<1x32x128xbf16> to vector<32x128xbf16>
    %cst = arith.constant dense<0.000000e+00> : vector<64x128xf32>
    %16 = tpu.matmul %13, %15, %cst {dimension_numbers = #tpu.dot_dimension_numbers<[1], [0], [0], [1], [0, 0, 1, 1], [], []>} : vector<64x32xbf16>, vector<32x128xbf16>, vector<64x128xf32> -> vector<64x128xf32>
    %c1 = arith.constant 1 : index
    %c0_4 = arith.constant 0 : index
    %c0_5 = arith.constant 0 : index
    %17 = vector.load %arg2[%c1, %c0_4, %c0_5] : memref<3x32x128xbf16, #tpu.memory_space<vmem>>, vector<1x32x128xbf16>
    %18 = vector.shape_cast %17 : vector<1x32x128xbf16> to vector<32x128xbf16>
    %cst_6 = arith.constant dense<0.000000e+00> : vector<64x128xf32>
    %19 = tpu.matmul %13, %18, %cst_6 {dimension_numbers = #tpu.dot_dimension_numbers<[1], [0], [0], [1], [0, 0, 1, 1], [], []>} : vector<64x32xbf16>, vector<32x128xbf16>, vector<64x128xf32> -> vector<64x128xf32>
    %20 = arith.addf %16, %19 : vector<64x128xf32>
    %c2 = arith.constant 2 : index
    %c0_7 = arith.constant 0 : index
    %c0_8 = arith.constant 0 : index
    %21 = vector.load %arg2[%c2, %c0_7, %c0_8] : memref<3x32x128xbf16, #tpu.memory_space<vmem>>, vector<1x32x128xbf16>
    %22 = vector.shape_cast %21 : vector<1x32x128xbf16> to vector<32x128xbf16>
    %cst_9 = arith.constant dense<0.000000e+00> : vector<64x128xf32>
    %23 = tpu.matmul %13, %22, %cst_9 {dimension_numbers = #tpu.dot_dimension_numbers<[1], [0], [0], [1], [0, 0, 1, 1], [], []>} : vector<64x32xbf16>, vector<32x128xbf16>, vector<64x128xf32> -> vector<64x128xf32>
    %24 = arith.addf %20, %23 : vector<64x128xf32>
    %c0_10 = arith.constant 0 : index
    %c0_11 = arith.constant 0 : index
    %25 = vector.load %arg3[%c0_10, %c0_11] : memref<64x128xf32, #tpu.memory_space<vmem>>, vector<64x128xf32>
    tpu.vector_store %arg3[%c0_10, %c0_11], %24 {strides = array<i32>} : memref<64x128xf32, #tpu.memory_space<vmem>>, vector<64x128xf32>,
    return
  }
  func.func @transform_0(%arg0: i32) -> (i32, i32) {
    %c0_i32 = arith.constant 0 : i32
    %c0_i32_0 = arith.constant 0 : i32
    return %arg0, %c0_i32 : i32, i32
  }
  func.func @transform_1(%arg0: i32) -> (i32, i32, i32) {
    %c0_i32 = arith.constant 0 : i32
    %c0_i32_0 = arith.constant 0 : i32
    %c0_i32_1 = arith.constant 0 : i32
    %c0_i32_2 = arith.constant 0 : i32
    return %c0_i32, %c0_i32_0, %c0_i32_1 : i32, i32, i32
  }
  func.func @transform_2(%arg0: i32) -> (i32, i32) {
    %c0_i32 = arith.constant 0 : i32
    %c0_i32_0 = arith.constant 0 : i32
    return %arg0, %c0_i32 : i32, i32
  }
}

</mosaic_0001>

<llo_original>
// kernel: tpu_custom_call.1
$region0: #{tpu_custom_call.1}
  #allocation0 [shape = 'u32[]', space=smem, size = 0x4, offset = 0x4, fixed_abs, tag = 'smem constant byte address 0x4 - core index']
  #allocation1 [shape = 'u32[144,128]{1,0:T(1,128)}', space=vmem, size = 0x12000, scoped, tag = 'internal scratch']
  %s0 = inlined_call_operand.vmem [shape: s32[64,1], index: 0, kind: input, shape index: {}]
  %s1 = inlined_call_operand.vmem [shape: bf16[3,32,128], index: 1, kind: input, shape index: {}]
  %s2 = inlined_call_operand.hbm [shape: f32[64,128], index: 2, kind: output, shape index: {}]
  %s3 = sld [smem:[#allocation0]]
  $region18: #{tpu_custom_call.1} parent=0
    _
  %s5 = ssub.s32 1, %s3
  %s6 = scalar_select 0, %s5, %s3
  $region1: #{tpu_custom_call.1} parent=0
    #allocation2 [shape = 'u8[32768]{0}', space=vmem, size = 0x8000, scoped, tag = 'output window, operand 0, single buffered']
    #allocation3 [shape = 's32[1]{0}', space=sflag, size = 0x4, scoped, tag = 'scoped memory for tpu_custom_call.1']
    %7 = vsyncpa [#allocation3], 0
    // Predicated region
    $region2: #{tpu_custom_call.1} parent=1 // pred_check
      _
    $region3: #{tpu_custom_call.1} parent=1 // pred_check_branch
      %9 = sbr.rel (0) target = $region5
    $region4: #{tpu_custom_call.1} parent=1 // pred_region
      _
    $region5: #{tpu_custom_call.1} parent=1 // pred_fallthru
      _
    // Predicated region
    $region6: #{tpu_custom_call.1} parent=1 // pred_check
      _
    $region7: #{tpu_custom_call.1} parent=1 // pred_check_branch
      %11 = sbr.rel (0) target = $region9
    $region8: #{tpu_custom_call.1} parent=1 // pred_region
      _
    $region9: #{tpu_custom_call.1} parent=1 // pred_fallthru
      _
    %v13 = vld [vmem:[%s0] sm:$0xff]
    %v14 = vld [vmem:[%s0 + $0x8] sm:$0xff]
    %v15 = vld [vmem:[%s0 + $0x10] sm:$0xff]
    %v16 = vld [vmem:[%s0 + $0x18] sm:$0xff]
    %v17 = vld [vmem:[%s0 + $0x20] sm:$0xff]
    %v18 = vld [vmem:[%s0 + $0x28] sm:$0xff]
    %v19 = vld [vmem:[%s0 + $0x30] sm:$0xff]
    %v20 = vld [vmem:[%s0 + $0x38] sm:$0xff]
    %vm21 = vcmp.gt.s32.totalorder %v13, 4294967280
    %v22 = vsel %vm21, %v13, 4294967280
    %vm23 = vcmp.gt.s32.totalorder %v14, 4294967280
    %v24 = vsel %vm23, %v14, 4294967280
    %vm25 = vcmp.gt.s32.totalorder %v15, 4294967280
    %v26 = vsel %vm25, %v15, 4294967280
    %vm27 = vcmp.gt.s32.totalorder %v16, 4294967280
    %v28 = vsel %vm27, %v16, 4294967280
    %vm29 = vcmp.gt.s32.totalorder %v17, 4294967280
    %v30 = vsel %vm29, %v17, 4294967280
    %vm31 = vcmp.gt.s32.totalorder %v18, 4294967280
    %v32 = vsel %vm31, %v18, 4294967280
    %vm33 = vcmp.gt.s32.totalorder %v19, 4294967280
    %v34 = vsel %vm33, %v19, 4294967280
    %vm35 = vcmp.gt.s32.totalorder %v20, 4294967280
    %v36 = vsel %vm35, %v20, 4294967280
    %vm37 = vcmp.lt.s32.totalorder %v22, 15
    %v38 = vsel %vm37, %v22, 15
    %vm39 = vcmp.lt.s32.totalorder %v24, 15
    %v40 = vsel %vm39, %v24, 15
    %vm41 = vcmp.lt.s32.totalorder %v26, 15
    %v42 = vsel %vm41, %v26, 15
    %vm43 = vcmp.lt.s32.totalorder %v28, 15
    %v44 = vsel %vm43, %v28, 15
    %vm45 = vcmp.lt.s32.totalorder %v30, 15
    %v46 = vsel %vm45, %v30, 15
    %vm47 = vcmp.lt.s32.totalorder %v32, 15
    %v48 = vsel %vm47, %v32, 15
    %vm49 = vcmp.lt.s32.totalorder %v34, 15
    %v50 = vsel %vm49, %v34, 15
    %vm51 = vcmp.lt.s32.totalorder %v36, 15
    %v52 = vsel %vm51, %v36, 15
    %v53 = vadd.s32 %v38, 16
    %v54 = vadd.s32 %v40, 16
    %v55 = vadd.s32 %v42, 16
    %v56 = vadd.s32 %v44, 16
    %v57 = vadd.s32 %v46, 16
    %v58 = vadd.s32 %v48, 16
    %v59 = vadd.s32 %v50, 16
    %v60 = vadd.s32 %v52, 16
    %v61 = vlaneseq
    %v62 = vand.u32 %v61, 127
    %63 = vset.pattern.permute.xlu0 0
    %64 = vperm.xlu0 %63, %v53
    %v65 = vpop.permute.xlu0 %64
    %66 = vset.pattern.permute.xlu0 0
    %67 = vperm.xlu0 %66, %v54
    %v68 = vpop.permute.xlu0 %67
    %69 = vset.pattern.permute.xlu0 0
    %70 = vperm.xlu0 %69, %v55
    %v71 = vpop.permute.xlu0 %70
    %72 = vset.pattern.permute.xlu0 0
    %73 = vperm.xlu0 %72, %v56
    %v74 = vpop.permute.xlu0 %73
    %75 = vset.pattern.permute.xlu0 0
    %76 = vperm.xlu0 %75, %v57
    %v77 = vpop.permute.xlu0 %76
    %78 = vset.pattern.permute.xlu0 0
    %79 = vperm.xlu0 %78, %v58
    %v80 = vpop.permute.xlu0 %79
    %81 = vset.pattern.permute.xlu0 0
    %82 = vperm.xlu0 %81, %v59
    %v83 = vpop.permute.xlu0 %82
    %84 = vset.pattern.permute.xlu0 0
    %85 = vperm.xlu0 %84, %v60
    %v86 = vpop.permute.xlu0 %85
    %vm87 = vcmp.eq.s32.totalorder %v65, %v62
    %vm88 = vcmp.eq.s32.totalorder %v68, %v62
    %vm89 = vcmp.eq.s32.totalorder %v71, %v62
    %vm90 = vcmp.eq.s32.totalorder %v74, %v62
    %vm91 = vcmp.eq.s32.totalorder %v77, %v62
    %vm92 = vcmp.eq.s32.totalorder %v80, %v62
    %vm93 = vcmp.eq.s32.totalorder %v83, %v62
    %vm94 = vcmp.eq.s32.totalorder %v86, %v62
    %v95 = vsel %vm87, 1, 0
    %v96 = vsel %vm88, 1, 0
    %v97 = vsel %vm89, 1, 0
    %v98 = vsel %vm90, 1, 0
    %v99 = vsel %vm91, 1, 0
    %v100 = vsel %vm92, 1, 0
    %v101 = vsel %vm93, 1, 0
    %v102 = vsel %vm94, 1, 0
    %v103 = vcvt.s32.f32 %v95
    %v104 = vcvt.s32.f32 %v96
    %v105 = vcvt.s32.f32 %v97
    %v106 = vcvt.s32.f32 %v98
    %v107 = vcvt.s32.f32 %v99
    %v108 = vcvt.s32.f32 %v100
    %v109 = vcvt.s32.f32 %v101
    %v110 = vcvt.s32.f32 %v102
    %v111 = vpack.c.bf16 %v104, %v103
    %v112 = vpack.c.bf16 %v106, %v105
    %v113 = vpack.c.bf16 %v108, %v107
    %v114 = vpack.c.bf16 %v110, %v109
    %v115 = vld [vmem:[%s1] sm:$0xf]
    %v116 = vld [vmem:[%s1 + $0x4] sm:$0xf]
    %v117 = vld [vmem:[%s1 + $0x8] sm:$0xf]
    %v118 = vld [vmem:[%s1 + $0xc] sm:$0xf]
    %s119 = scalar_lea.vmem %s1, 16
    %v120 = vld [vmem:[%s119] sm:$0xf]
    %v121 = vld [vmem:[%s119 + $0x4] sm:$0xf]
    %v122 = vld [vmem:[%s119 + $0x8] sm:$0xf]
    %v123 = vld [vmem:[%s119 + $0xc] sm:$0xf]
    %v128 = vunpack.c.l.b16 %v120
    %v129 = vunpack.c.l.b16 %v121
    %v130 = vunpack.c.l.b16 %v122
    %v131 = vunpack.c.l.b16 %v123
    %v132 = vpack.c.b16 %v129, %v128
    %v133 = vpack.c.b16 %v131, %v130
    %vm136 = vcmask 261120
    %v138 = vsel %vm136, %v111, 0
    %v141 = vsel %vm136, %v112, 0
    %v144 = vsel %vm136, %v113, 0
    %v147 = vsel %vm136, %v114, 0
    %149 = vmatprep.subr.bf16.mxu0 0
    %150 = vmatpush1.bf16.msra.mxu0 %v132
    %151 = vmatprep.subr.bf16.mxu0 0
    %152 = vmatpush1.bf16.msra.mxu0 %v133
    %153 = vmatprep.subr.bf16.mxu0 0
    %154 = vmatpush1.bf16.msra.mxu0 0
    %155 = vmatprep.subr.bf16.mxu0 0
    %156 = vmatpush1.bf16.msra.mxu0 0
    %157 = vmatprep.subr.bf16.mxu0 0
    %158 = vmatpush1.bf16.msra.mxu0 0
    %159 = vmatprep.subr.bf16.mxu0 0
    %160 = vmatpush1.bf16.msra.mxu0 0
    %161 = vmatprep.subr.bf16.mxu0 0
    %162 = vmatpush1.bf16.msra.mxu0 0
    %163 = vmatprep.subr.bf16.mxu0 0
    %164 = vmatpush1.bf16.msra.mxu0 0
    %165 = vmatprep.subr.bf16.mxu0 0
    %166 = vmatpush1.bf16.msra.mxu0 0
    %167 = vmatprep.subr.bf16.mxu0 0
    %168 = vmatpush1.bf16.msra.mxu0 0
    %169 = vmatprep.subr.bf16.mxu0 0
    %170 = vmatpush1.bf16.msra.mxu0 0
    %171 = vmatprep.subr.bf16.mxu0 0
    %172 = vmatpush1.bf16.msra.mxu0 0
    %173 = vmatprep.subr.bf16.mxu0 0
    %174 = vmatpush1.bf16.msra.mxu0 0
    %175 = vmatprep.subr.bf16.mxu0 0
    %176 = vmatpush1.bf16.msra.mxu0 0
    %177 = vmatprep.subr.bf16.mxu0 0
    %178 = vmatpush1.bf16.msra.mxu0 0
    %179 = vmatprep.subr.bf16.mxu0 0
    %180 = vmatpush1.bf16.msra.mxu0 0
    %181 = vmatprep.mubr.bf16.mxu0 0
    %182 = vmatmul.mubr.bf16.gmra.mrb[0].mxu0 %v138
    %v183 = vpop.f32.mrb[0].mxu0
    %v184 = vadd.f32 0.0, %v183
    %v185 = vpop.f32.mrb[0].mxu0
    %v186 = vpop.f32.mrb[0].mxu0
    %v187 = vadd.f32 0.0, %v186
    %v188 = vpop.f32.mrb[0].mxu0
    %189 = vmatprep.mubr.bf16.mxu0 0
    %190 = vmatmul.mubr.bf16.gmra.mrb[0].mxu0 %v141
    %v191 = vpop.f32.mrb[0].mxu0
    %v192 = vadd.f32 0.0, %v191
    %v193 = vpop.f32.mrb[0].mxu0
    %v194 = vpop.f32.mrb[0].mxu0
    %v195 = vadd.f32 0.0, %v194
    %v196 = vpop.f32.mrb[0].mxu0
    %197 = vmatprep.mubr.bf16.mxu0 0
    %198 = vmatmul.mubr.bf16.gmra.mrb[0].mxu0 %v144
    %v199 = vpop.f32.mrb[0].mxu0
    %v200 = vadd.f32 0.0, %v199
    %v201 = vpop.f32.mrb[0].mxu0
    %v202 = vpop.f32.mrb[0].mxu0
    %v203 = vadd.f32 0.0, %v202
    %v204 = vpop.f32.mrb[0].mxu0
    %205 = vmatprep.mubr.bf16.mxu0 0
    %206 = vmatmul.mubr.bf16.gmra.mrb[0].mxu0 %v147
    %v207 = vpop.f32.mrb[0].mxu0
    %v208 = vadd.f32 0.0, %v207
    %v209 = vpop.f32.mrb[0].mxu0
    %v210 = vpop.f32.mrb[0].mxu0
    %v211 = vadd.f32 0.0, %v210
    %v212 = vpop.f32.mrb[0].mxu0
    %213 = vdwg.mxu0
    %v218 = vunpack.c.l.b16 %v115
    %v219 = vunpack.c.l.b16 %v116
    %v220 = vunpack.c.l.b16 %v117
    %v221 = vunpack.c.l.b16 %v118
    %v222 = vpack.c.b16 %v219, %v218
    %v223 = vpack.c.b16 %v221, %v220
    %226 = vmatprep.subr.bf16.mxu0 0
    %227 = vmatpush1.bf16.msra.mxu0 %v222
    %228 = vmatprep.subr.bf16.mxu0 0
    %229 = vmatpush1.bf16.msra.mxu0 %v223
    %230 = vmatprep.subr.bf16.mxu0 0
    %231 = vmatpush1.bf16.msra.mxu0 0
    %232 = vmatprep.subr.bf16.mxu0 0
    %233 = vmatpush1.bf16.msra.mxu0 0
    %234 = vmatprep.subr.bf16.mxu0 0
    %235 = vmatpush1.bf16.msra.mxu0 0
    %236 = vmatprep.subr.bf16.mxu0 0
    %237 = vmatpush1.bf16.msra.mxu0 0
    %238 = vmatprep.subr.bf16.mxu0 0
    %239 = vmatpush1.bf16.msra.mxu0 0
    %240 = vmatprep.subr.bf16.mxu0 0
    %241 = vmatpush1.bf16.msra.mxu0 0
    %242 = vmatprep.subr.bf16.mxu0 0
    %243 = vmatpush1.bf16.msra.mxu0 0
    %244 = vmatprep.subr.bf16.mxu0 0
    %245 = vmatpush1.bf16.msra.mxu0 0
    %246 = vmatprep.subr.bf16.mxu0 0
    %247 = vmatpush1.bf16.msra.mxu0 0
    %248 = vmatprep.subr.bf16.mxu0 0
    %249 = vmatpush1.bf16.msra.mxu0 0
    %250 = vmatprep.subr.bf16.mxu0 0
    %251 = vmatpush1.bf16.msra.mxu0 0
    %252 = vmatprep.subr.bf16.mxu0 0
    %253 = vmatpush1.bf16.msra.mxu0 0
    %254 = vmatprep.subr.bf16.mxu0 0
    %255 = vmatpush1.bf16.msra.mxu0 0
    %256 = vmatprep.subr.bf16.mxu0 0
    %257 = vmatpush1.bf16.msra.mxu0 0
    %258 = vmatprep.mubr.bf16.mxu0 0
    %259 = vmatmul.mubr.bf16.gmra.mrb[0].mxu0 %v138
    %v260 = vpop.f32.mrb[0].mxu0
    %v261 = vadd.f32 %v184, %v260
    %v262 = vpop.f32.mrb[0].mxu0
    %v263 = vpop.f32.mrb[0].mxu0
    %v264 = vadd.f32 %v187, %v263
    %v265 = vpop.f32.mrb[0].mxu0
    %266 = vmatprep.mubr.bf16.mxu0 0
    %267 = vmatmul.mubr.bf16.gmra.mrb[0].mxu0 %v141
    %v268 = vpop.f32.mrb[0].mxu0
    %v269 = vadd.f32 %v192, %v268
    %v270 = vpop.f32.mrb[0].mxu0
    %v271 = vpop.f32.mrb[0].mxu0
    %v272 = vadd.f32 %v195, %v271
    %v273 = vpop.f32.mrb[0].mxu0
    %274 = vmatprep.mubr.bf16.mxu0 0
    %275 = vmatmul.mubr.bf16.gmra.mrb[0].mxu0 %v144
    %v276 = vpop.f32.mrb[0].mxu0
    %v277 = vadd.f32 %v200, %v276
    %v278 = vpop.f32.mrb[0].mxu0
    %v279 = vpop.f32.mrb[0].mxu0
    %v280 = vadd.f32 %v203, %v279
    %v281 = vpop.f32.mrb[0].mxu0
    %282 = vmatprep.mubr.bf16.mxu0 0
    %283 = vmatmul.mubr.bf16.gmra.mrb[0].mxu0 %v147
    %v284 = vpop.f32.mrb[0].mxu0
    %v285 = vadd.f32 %v208, %v284
    %v286 = vpop.f32.mrb[0].mxu0
    %v287 = vpop.f32.mrb[0].mxu0
    %v288 = vadd.f32 %v211, %v287
    %v289 = vpop.f32.mrb[0].mxu0
    %290 = vdwg.mxu0
    %s291 = scalar_lea.vmem %s1, 32
    %v292 = vld [vmem:[%s291] sm:$0xf]
    %v293 = vld [vmem:[%s291 + $0x4] sm:$0xf]
    %v294 = vld [vmem:[%s291 + $0x8] sm:$0xf]
    %v295 = vld [vmem:[%s291 + $0xc] sm:$0xf]
    %v300 = vunpack.c.l.b16 %v292
    %v301 = vunpack.c.l.b16 %v293
    %v302 = vunpack.c.l.b16 %v294
    %v303 = vunpack.c.l.b16 %v295
    %v304 = vpack.c.b16 %v301, %v300
    %v305 = vpack.c.b16 %v303, %v302
    %308 = vmatprep.subr.bf16.mxu0 0
    %309 = vmatpush1.bf16.msra.mxu0 %v304
    %310 = vmatprep.subr.bf16.mxu0 0
    %311 = vmatpush1.bf16.msra.mxu0 %v305
    %312 = vmatprep.subr.bf16.mxu0 0
    %313 = vmatpush1.bf16.msra.mxu0 0
    %314 = vmatprep.subr.bf16.mxu0 0
    %315 = vmatpush1.bf16.msra.mxu0 0
    %316 = vmatprep.subr.bf16.mxu0 0
    %317 = vmatpush1.bf16.msra.mxu0 0
    %318 = vmatprep.subr.bf16.mxu0 0
    %319 = vmatpush1.bf16.msra.mxu0 0
    %320 = vmatprep.subr.bf16.mxu0 0
    %321 = vmatpush1.bf16.msra.mxu0 0
    %322 = vmatprep.subr.bf16.mxu0 0
    %323 = vmatpush1.bf16.msra.mxu0 0
    %324 = vmatprep.subr.bf16.mxu0 0
    %325 = vmatpush1.bf16.msra.mxu0 0
    %326 = vmatprep.subr.bf16.mxu0 0
    %327 = vmatpush1.bf16.msra.mxu0 0
    %328 = vmatprep.subr.bf16.mxu0 0
    %329 = vmatpush1.bf16.msra.mxu0 0
    %330 = vmatprep.subr.bf16.mxu0 0
    %331 = vmatpush1.bf16.msra.mxu0 0
    %332 = vmatprep.subr.bf16.mxu0 0
    %333 = vmatpush1.bf16.msra.mxu0 0
    %334 = vmatprep.subr.bf16.mxu0 0
    %335 = vmatpush1.bf16.msra.mxu0 0
    %336 = vmatprep.subr.bf16.mxu0 0
    %337 = vmatpush1.bf16.msra.mxu0 0
    %338 = vmatprep.subr.bf16.mxu0 0
    %339 = vmatpush1.bf16.msra.mxu0 0
    %340 = vmatprep.mubr.bf16.mxu0 0
    %341 = vmatmul.mubr.bf16.gmra.mrb[0].mxu0 %v138
    %v342 = vpop.f32.mrb[0].mxu0
    %v343 = vadd.f32 0.0, %v342
    %v344 = vpop.f32.mrb[0].mxu0
    %v345 = vpop.f32.mrb[0].mxu0
    %v346 = vadd.f32 0.0, %v345
    %v347 = vpop.f32.mrb[0].mxu0
    %348 = vmatprep.mubr.bf16.mxu0 0
    %349 = vmatmul.mubr.bf16.gmra.mrb[0].mxu0 %v141
    %v350 = vpop.f32.mrb[0].mxu0
    %v351 = vadd.f32 0.0, %v350
    %v352 = vpop.f32.mrb[0].mxu0
    %v353 = vpop.f32.mrb[0].mxu0
    %v354 = vadd.f32 0.0, %v353
    %v355 = vpop.f32.mrb[0].mxu0
    %356 = vmatprep.mubr.bf16.mxu0 0
    %357 = vmatmul.mubr.bf16.gmra.mrb[0].mxu0 %v144
    %v358 = vpop.f32.mrb[0].mxu0
    %v359 = vadd.f32 0.0, %v358
    %v360 = vpop.f32.mrb[0].mxu0
    %v361 = vpop.f32.mrb[0].mxu0
    %v362 = vadd.f32 0.0, %v361
    %v363 = vpop.f32.mrb[0].mxu0
    %364 = vmatprep.mubr.bf16.mxu0 0
    %365 = vmatmul.mubr.bf16.gmra.mrb[0].mxu0 %v147
    %v366 = vpop.f32.mrb[0].mxu0
    %v367 = vadd.f32 0.0, %v366
    %v368 = vpop.f32.mrb[0].mxu0
    %v369 = vpop.f32.mrb[0].mxu0
    %v370 = vadd.f32 0.0, %v369
    %v371 = vpop.f32.mrb[0].mxu0
    %372 = vdwg.mxu0
    %v373 = vadd.f32 %v261, %v343
    %v374 = vadd.f32 %v264, %v346
    %v375 = vadd.f32 %v269, %v351
    %v376 = vadd.f32 %v272, %v354
    %v377 = vadd.f32 %v277, %v359
    %v378 = vadd.f32 %v280, %v362
    %v379 = vadd.f32 %v285, %v367
    %v380 = vadd.f32 %v288, %v370
    %381 = vst [vmem:[#allocation2] sm:$0xff] %v373
    %382 = vst [vmem:[#allocation2 + $0x8] sm:$0xff] %v374
    %383 = vst [vmem:[#allocation2 + $0x10] sm:$0xff] %v375
    %384 = vst [vmem:[#allocation2 + $0x18] sm:$0xff] %v376
    %385 = vst [vmem:[#allocation2 + $0x20] sm:$0xff] %v377
    %386 = vst [vmem:[#allocation2 + $0x28] sm:$0xff] %v378
    %387 = vst [vmem:[#allocation2 + $0x30] sm:$0xff] %v379
    %388 = vst [vmem:[#allocation2 + $0x38] sm:$0xff] %v380
    // Predicated region
    $region10: #{tpu_custom_call.1} parent=1 // pred_check
      _
    $region11: #{tpu_custom_call.1} parent=1 // pred_check_branch
      %390 = sbr.rel (0) target = $region13
    $region12: #{tpu_custom_call.1} parent=1 // pred_region
      %s392 = ssub.s32 1024, 1024
      %393 = vsyncadd [#allocation3], %s392
      %s394 = sshll.u32 [#allocation2], 4
      %s395 = int_to_ptr.vmem [resolvable:$true] %s394
      %400 = dma.vmem_to_hbm [thread:$0]  %s395, 1024, %s2, [#allocation3], 128, 128, 8
    $region13: #{tpu_custom_call.1} parent=1 // pred_fallthru
      _
    // Predicated region
    $region14: #{tpu_custom_call.1} parent=1 // pred_check
      _
    $region15: #{tpu_custom_call.1} parent=1 // pred_check_branch
      %402 = sbr.rel (0) target = $region17
    $region16: #{tpu_custom_call.1} parent=1 // pred_region
      %403 = dma.done [#allocation3], 1024
    $region17: #{tpu_custom_call.1} parent=1 // pred_fallthru
      _
    %404 = vsyncpa [#allocation3], 1

</llo_original>
